<compile_context>
chip_gen: v7x
topology: tpu7x:2x2x1
jax: 0.10.0
libtpu: 0.0.40
codegen_flags: <defaults>
</compile_context>

<pallas_src>
import jax
import jax.numpy as jnp
import numpy as np
from jax.experimental import pallas as pl
from jax.experimental.pallas import tpu as pltpu

DIM = 2                        # number of input variables
ORDER = 3                      # polynomial order
NUM = (ORDER + 1) ** DIM       # (order+1)^dim features of the Linear layer
LANE = 128                     # lane width


# --------------------------------------------------------------------------
# Host-side weight pre-fold: Legendre -> monomial, Linear weights, bias.
# --------------------------------------------------------------------------
def _legendre_monomial_matrix(order):
    """L[j, k] = coefficient of x^k in P_j(x) (Legendre recurrence)."""
    L = np.zeros((order + 1, order + 1), dtype=np.float64)
    L[0, 0] = 1.0
    if order >= 1:
        L[1, 1] = 1.0
    for k in range(1, order):
        L[k + 1, 1:] += (2 * k + 1) * L[k, :-1]
        L[k + 1, :] -= k * L[k - 1, :]
        L[k + 1, :] /= (k + 1)
    return L


_L = jnp.asarray(_legendre_monomial_matrix(ORDER), dtype=jnp.float32)


def _prefold_weights(w, b):
    """Fold Linear weights + Legendre->monomial transform + bias into flat
    monomial coefficients: out(x) = sum_p C[p0,..] prod_d x_d^{p_d}, bias in C[0,..,0]."""
    C = w.astype(jnp.float32).reshape((ORDER + 1,) * DIM)
    for d in range(DIM):
        C = jnp.moveaxis(jnp.tensordot(C, _L, axes=([d], [0])), -1, d)
    C = C.at[(0,) * DIM].add(b.astype(jnp.float32)[0])
    return C.reshape(-1)


# --------------------------------------------------------------------------
# Kernel: nested Horner evaluation of the multivariate polynomial.
# --------------------------------------------------------------------------
def _horner(xs, c_ref, d, offset):
    """Nested Horner over dims d..DIM-1. xs[d] is a (tile_rows, 128) slab,
    coefficients are SMEM scalars -> pure VPU mul/adds with scalar broadcasts."""
    stride = (ORDER + 1) ** (DIM - 1 - d)
    if d == DIM - 1:
        v = c_ref[offset + ORDER]
        for k in range(ORDER - 1, -1, -1):
            v = v * xs[d] + c_ref[offset + k]
        return v
    v = _horner(xs, c_ref, d + 1, offset + ORDER * stride)
    for k in range(ORDER - 1, -1, -1):
        v = v * xs[d] + _horner(xs, c_ref, d + 1, offset + k * stride)
    return v


def poly_kernel(xt_ref, c_ref, o_ref):
    # xt_ref: (DIM, tile_rows, 128) f32 VMEM  -- batch on sublanes x lanes.
    # c_ref:  (NUM,)                f32 SMEM  -- monomial coeffs (bias folded in).
    # o_ref:  (tile_rows, 128)      f32 VMEM  -- lane-dense output slab.
    xs = [xt_ref[d] for d in range(DIM)]
    o_ref[...] = _horner(xs, c_ref, 0, 0)


# --------------------------------------------------------------------------
# Wrapper.
# --------------------------------------------------------------------------
def _choose_tile_rows(rows_total, max_rows_per_block):
    """Multiple-of-8 row tile, balanced blocks, >=2 blocks when enough work
    (so both v7x TensorCores are fed), minimal padding."""
    tile = max(8, min(max_rows_per_block, pl.cdiv(rows_total, 8) * 8))
    nblocks = pl.cdiv(rows_total, tile)
    if nblocks < 2 and rows_total > 8:
        nblocks = 2
    return max(8, pl.cdiv(pl.cdiv(rows_total, nblocks), 8) * 8)


def multivariate_poly(x, w, b, *, max_rows_per_block=1024):
    """x: (N, DIM) f32, w: (NUM,) f32, b: (1,) f32 -> (N, 1) f32.
    max_rows_per_block=1024 -> up to 128K batch elements per grid step
    (~3-5 MiB VMEM incl. double buffering; safe for v7x's 64 MiB)."""
    n = x.shape[0]
    assert x.shape[1] == DIM

    rows_total = pl.cdiv(n, LANE)
    tile_rows = _choose_tile_rows(rows_total, max_rows_per_block)
    rows_pad = pl.cdiv(rows_total, tile_rows) * tile_rows
    n_pad = rows_pad * LANE
    grid = rows_pad // tile_rows

    c_flat = _prefold_weights(w, b)

    # TODO(synk): accept x pre-laid-out as (DIM, rows, 128) struct-of-arrays (or
    # deinterleave in-kernel) to drop this wrapper transpose/pad pass, which is
    # the main remaining HBM cost on v5e.
    xt = jnp.pad(x.astype(jnp.float32), ((0, n_pad - n), (0, 0))).T.reshape(
        DIM, rows_pad, LANE)

    out = pl.pallas_call(
        poly_kernel,
        out_shape=jax.ShapeDtypeStruct((rows_pad, LANE), jnp.float32),
        grid_spec=pltpu.PrefetchScalarGridSpec(
            num_scalar_prefetch=0,
            grid=(grid,),
            in_specs=[
                pl.BlockSpec((DIM, tile_rows, LANE), lambda i: (0, i, 0)),
                pl.BlockSpec(memory_space=pltpu.MemorySpace.SMEM),
            ],
            out_specs=pl.BlockSpec((tile_rows, LANE), lambda i: (i, 0)),
        ),
        compiler_params=pltpu.CompilerParams(
            dimension_semantics=("parallel",),
        ),
    )(xt, c_flat)

    # TODO(synk): consumers could take the padded (rows, 128) slab directly and
    # skip this slice/reshape HBM round trip.
    return out.reshape(-1)[:n].reshape(n, 1)


# --------------------------------------------------------------------------
# Pure-JAX reference mirroring the PyTorch forward (explicit basis + matmul).
# --------------------------------------------------------------------------
def _legendre_all(x1d):
    p = [jnp.ones_like(x1d), x1d]
    for k in range(1, ORDER):
        p.append(((2 * k + 1) * x1d * p[k] - k * p[k - 1]) / (k + 1))
    return jnp.stack(p[:ORDER + 1], axis=-1)          # (N, ORDER+1)


def reference_forward(x, w, b):
    n = x.shape[0]
    feats = jnp.ones((n, 1), jnp.float32)
    for d in range(DIM):
        leg = _legendre_all(x[:, d].astype(jnp.float32))
        feats = (feats[:, :, None] * leg[:, None, :]).reshape(n, -1)  # dim 0 slowest
    return feats @ w.reshape(NUM, 1) + b[0]


if __name__ == "__main__":
    key = jax.random.PRNGKey(0)
    kx, kw, kb, kx2 = jax.random.split(key, 4)

    # Deterministic Linear(num, 1) init, matching torch's U(-1/sqrt(num), 1/sqrt(num)).
    bound = 1.0 / np.sqrt(NUM)
    w = jax.random.uniform(kw, (NUM,), jnp.float32, minval=-bound, maxval=bound)
    b = jax.random.uniform(kb, (1,), jnp.float32, minval=-bound, maxval=bound)

    # Small batch: single (8,128) block.
    N = 1000
    x = jax.random.uniform(kx, (N, DIM), jnp.float32, minval=-1.0, maxval=1.0)
    out = jax.block_until_ready(multivariate_poly(x, w, b))
    ref = reference_forward(x, w, b)
    assert out.shape == (N, 1)
    np.testing.assert_allclose(np.asarray(out), np.asarray(ref), rtol=1e-5, atol=2e-5)

    # Slightly larger batch: exercises the multi-block ("parallel") path.
    N2 = 4096
    x2 = jax.random.uniform(kx2, (N2, DIM), jnp.float32, minval=-1.0, maxval=1.0)
    out2 = jax.block_until_ready(multivariate_poly(x2, w, b))
    ref2 = reference_forward(x2, w, b)
    assert out2.shape == (N2, 1)
    np.testing.assert_allclose(np.asarray(out2), np.asarray(ref2), rtol=1e-5, atol=2e-5)

    print("KERNEL_OK")
</pallas_src>

<mosaic_0001>
module attributes {stable_mosaic.version = 11 : i64} {
  func.func @poly_kernel(%arg0: i32, %arg1: memref<2x8x128xf32, #tpu.memory_space<vmem>>, %arg2: memref<16xf32, #tpu.memory_space<smem>>, %arg3: memref<8x128xf32, #tpu.memory_space<vmem>>) attributes {dimension_semantics = [#tpu.dimension_semantics<parallel>], iteration_bounds = array<i64: 1>, scalar_prefetch = 0 : i64, scratch_operands = 0 : i64, tpu.core_type = #tpu.core_type<tc>, window_params = [{transform_indices = @transform_0, window_bounds = array<i64: 2, 8, 128>}, {transform_indices = @transform_1, window_bounds = array<i64: 16>}, {transform_indices = @transform_2, window_bounds = array<i64: 8, 128>}]} {
    %c0 = arith.constant 0 : index
    %c0_0 = arith.constant 0 : index
    %c0_1 = arith.constant 0 : index
    %0 = vector.load %arg1[%c0, %c0_0, %c0_1] : memref<2x8x128xf32, #tpu.memory_space<vmem>>, vector<1x8x128xf32>
    %1 = vector.shape_cast %0 : vector<1x8x128xf32> to vector<8x128xf32>
    %c1 = arith.constant 1 : index
    %c0_2 = arith.constant 0 : index
    %c0_3 = arith.constant 0 : index
    %2 = vector.load %arg1[%c1, %c0_2, %c0_3] : memref<2x8x128xf32, #tpu.memory_space<vmem>>, vector<1x8x128xf32>
    %3 = vector.shape_cast %2 : vector<1x8x128xf32> to vector<8x128xf32>
    %c15 = arith.constant 15 : index
    %4 = memref.load %arg2[%c15] : memref<16xf32, #tpu.memory_space<smem>>
    %5 = vector.broadcast %4 : f32 to vector<8x128xf32>
    %6 = arith.mulf %5, %3 : vector<8x128xf32>
    %c14 = arith.constant 14 : index
    %7 = memref.load %arg2[%c14] : memref<16xf32, #tpu.memory_space<smem>>
    %8 = vector.broadcast %7 : f32 to vector<8x128xf32>
    %9 = arith.addf %6, %8 : vector<8x128xf32>
    %10 = arith.mulf %9, %3 : vector<8x128xf32>
    %c13 = arith.constant 13 : index
    %11 = memref.load %arg2[%c13] : memref<16xf32, #tpu.memory_space<smem>>
    %12 = vector.broadcast %11 : f32 to vector<8x128xf32>
    %13 = arith.addf %10, %12 : vector<8x128xf32>
    %14 = arith.mulf %13, %3 : vector<8x128xf32>
    %c12 = arith.constant 12 : index
    %15 = memref.load %arg2[%c12] : memref<16xf32, #tpu.memory_space<smem>>
    %16 = vector.broadcast %15 : f32 to vector<8x128xf32>
    %17 = arith.addf %14, %16 : vector<8x128xf32>
    %18 = arith.mulf %17, %1 : vector<8x128xf32>
    %c11 = arith.constant 11 : index
    %19 = memref.load %arg2[%c11] : memref<16xf32, #tpu.memory_space<smem>>
    %20 = vector.broadcast %19 : f32 to vector<8x128xf32>
    %21 = arith.mulf %20, %3 : vector<8x128xf32>
    %c10 = arith.constant 10 : index
    %22 = memref.load %arg2[%c10] : memref<16xf32, #tpu.memory_space<smem>>
    %23 = vector.broadcast %22 : f32 to vector<8x128xf32>
    %24 = arith.addf %21, %23 : vector<8x128xf32>
    %25 = arith.mulf %24, %3 : vector<8x128xf32>
    %c9 = arith.constant 9 : index
    %26 = memref.load %arg2[%c9] : memref<16xf32, #tpu.memory_space<smem>>
    %27 = vector.broadcast %26 : f32 to vector<8x128xf32>
    %28 = arith.addf %25, %27 : vector<8x128xf32>
    %29 = arith.mulf %28, %3 : vector<8x128xf32>
    %c8 = arith.constant 8 : index
    %30 = memref.load %arg2[%c8] : memref<16xf32, #tpu.memory_space<smem>>
    %31 = vector.broadcast %30 : f32 to vector<8x128xf32>
    %32 = arith.addf %29, %31 : vector<8x128xf32>
    %33 = arith.addf %18, %32 : vector<8x128xf32>
    %34 = arith.mulf %33, %1 : vector<8x128xf32>
    %c7 = arith.constant 7 : index
    %35 = memref.load %arg2[%c7] : memref<16xf32, #tpu.memory_space<smem>>
    %36 = vector.broadcast %35 : f32 to vector<8x128xf32>
    %37 = arith.mulf %36, %3 : vector<8x128xf32>
    %c6 = arith.constant 6 : index
    %38 = memref.load %arg2[%c6] : memref<16xf32, #tpu.memory_space<smem>>
    %39 = vector.broadcast %38 : f32 to vector<8x128xf32>
    %40 = arith.addf %37, %39 : vector<8x128xf32>
    %41 = arith.mulf %40, %3 : vector<8x128xf32>
    %c5 = arith.constant 5 : index
    %42 = memref.load %arg2[%c5] : memref<16xf32, #tpu.memory_space<smem>>
    %43 = vector.broadcast %42 : f32 to vector<8x128xf32>
    %44 = arith.addf %41, %43 : vector<8x128xf32>
    %45 = arith.mulf %44, %3 : vector<8x128xf32>
    %c4 = arith.constant 4 : index
    %46 = memref.load %arg2[%c4] : memref<16xf32, #tpu.memory_space<smem>>
    %47 = vector.broadcast %46 : f32 to vector<8x128xf32>
    %48 = arith.addf %45, %47 : vector<8x128xf32>
    %49 = arith.addf %34, %48 : vector<8x128xf32>
    %50 = arith.mulf %49, %1 : vector<8x128xf32>
    %c3 = arith.constant 3 : index
    %51 = memref.load %arg2[%c3] : memref<16xf32, #tpu.memory_space<smem>>
    %52 = vector.broadcast %51 : f32 to vector<8x128xf32>
    %53 = arith.mulf %52, %3 : vector<8x128xf32>
    %c2 = arith.constant 2 : index
    %54 = memref.load %arg2[%c2] : memref<16xf32, #tpu.memory_space<smem>>
    %55 = vector.broadcast %54 : f32 to vector<8x128xf32>
    %56 = arith.addf %53, %55 : vector<8x128xf32>
    %57 = arith.mulf %56, %3 : vector<8x128xf32>
    %c1_4 = arith.constant 1 : index
    %58 = memref.load %arg2[%c1_4] : memref<16xf32, #tpu.memory_space<smem>>
    %59 = vector.broadcast %58 : f32 to vector<8x128xf32>
    %60 = arith.addf %57, %59 : vector<8x128xf32>
    %61 = arith.mulf %60, %3 : vector<8x128xf32>
    %c0_5 = arith.constant 0 : index
    %62 = memref.load %arg2[%c0_5] : memref<16xf32, #tpu.memory_space<smem>>
    %63 = vector.broadcast %62 : f32 to vector<8x128xf32>
    %64 = arith.addf %61, %63 : vector<8x128xf32>
    %65 = arith.addf %50, %64 : vector<8x128xf32>
    %c0_6 = arith.constant 0 : index
    %c0_7 = arith.constant 0 : index
    %66 = vector.load %arg3[%c0_6, %c0_7] : memref<8x128xf32, #tpu.memory_space<vmem>>, vector<8x128xf32>
    tpu.vector_store %arg3[%c0_6, %c0_7], %65 {strides = array<i32>} : memref<8x128xf32, #tpu.memory_space<vmem>>, vector<8x128xf32>,
    return
  }
  func.func @transform_0(%arg0: i32) -> (i32, i32, i32) {
    %c0_i32 = arith.constant 0 : i32
    %c0_i32_0 = arith.constant 0 : i32
    %c0_i32_1 = arith.constant 0 : i32
    return %c0_i32, %arg0, %c0_i32_0 : i32, i32, i32
  }
  func.func @transform_1(%arg0: i32) -> i32 {
    %c0_i32 = arith.constant 0 : i32
    %c0_i32_0 = arith.constant 0 : i32
    return %c0_i32 : i32
  }
  func.func @transform_2(%arg0: i32) -> (i32, i32) {
    %c0_i32 = arith.constant 0 : i32
    %c0_i32_0 = arith.constant 0 : i32
    return %arg0, %c0_i32 : i32, i32
  }
}

</mosaic_0001>

<llo_original>
// kernel: tpu_custom_call.1
$region0: #{tpu_custom_call.1}
  #allocation0 [shape = 'u32[]', space=smem, size = 0x4, offset = 0x4, fixed_abs, tag = 'smem constant byte address 0x4 - core index']
  #allocation1 [shape = 'u32[144,128]{1,0:T(1,128)}', space=vmem, size = 0x12000, scoped, tag = 'internal scratch']
  %s0 = inlined_call_operand.hbm [shape: f32[2,8,128], index: 0, kind: input, shape index: {}]
  %s1 = inlined_call_operand.vmem [shape: f32[16], index: 1, kind: input, shape index: {}]
  %s2 = inlined_call_operand.hbm [shape: f32[8,128], index: 2, kind: output, shape index: {}]
  %s3 = sld [smem:[#allocation0]]
  $region26: #{tpu_custom_call.1} parent=0
    _
  %s5 = ssub.s32 1, %s3
  %s6 = scalar_select 0, %s5, %s3
  $region1: #{tpu_custom_call.1} parent=0
    #allocation2 [shape = 'u8[8192]{0}', space=vmem, size = 0x2000, scoped, tag = 'input window, operand 0, single buffered']
    #allocation3 [shape = 's32[1]{0}', space=sflag, size = 0x4, scoped, tag = 'scoped memory for tpu_custom_call.1']
    #allocation4 [shape = 's32[1]{0}', space=sflag, size = 0x4, scoped, tag = 'scoped memory for tpu_custom_call.1']
    #allocation5 [shape = 's32[1]{0}', space=sflag, size = 0x4, scoped, tag = 'scoped memory for tpu_custom_call.1']
    #allocation6 [shape = 'u8[512]{0}', space=smem, size = 0x200, scoped, tag = 'input window, operand 1, single buffered']
    #allocation7 [shape = 'u8[4096]{0}', space=vmem, size = 0x1000, scoped, tag = 'output window, operand 0, single buffered']
    %7 = vsyncpa [#allocation3], 0
    %8 = vsyncpa [#allocation5], 0
    %9 = vsyncpa [#allocation4], 0
    // Predicated region
    $region2: #{tpu_custom_call.1} parent=1 // pred_check
      _
    $region3: #{tpu_custom_call.1} parent=1 // pred_check_branch
      %11 = sbr.rel (0) target = $region5
    $region4: #{tpu_custom_call.1} parent=1 // pred_region
      %s13 = ssub.s32 256, 256
      %14 = vsyncadd [#allocation3], %s13
      %s15 = sshll.u32 [#allocation2], 4
      %s16 = int_to_ptr.vmem [resolvable:$true] %s15
      %21 = dma.hbm_to_vmem [thread:$0]  %s0, 256, %s16, [#allocation3], 128, 128, 8
    $region5: #{tpu_custom_call.1} parent=1 // pred_fallthru
      _
    // Predicated region
    $region6: #{tpu_custom_call.1} parent=1 // pred_check
      _
    $region7: #{tpu_custom_call.1} parent=1 // pred_check_branch
      %23 = sbr.rel (0) target = $region9
    $region8: #{tpu_custom_call.1} parent=1 // pred_region
      %s25 = ssub.s32 16, 16
      %26 = vsyncadd [#allocation5], %s25
      %s28 = sshll.u32 %s1, 4
      %s29 = int_to_ptr.vmem [resolvable:$true] %s28
      %31 = dma.vmem_to_smem %s29, 16, [#allocation6], [#allocation5]
    $region9: #{tpu_custom_call.1} parent=1 // pred_fallthru
      _
    // Predicated region
    $region10: #{tpu_custom_call.1} parent=1 // pred_check
      _
    $region11: #{tpu_custom_call.1} parent=1 // pred_check_branch
      %33 = sbr.rel (0) target = $region13
    $region12: #{tpu_custom_call.1} parent=1 // pred_region
      %34 = dma.done [#allocation3], 256
    $region13: #{tpu_custom_call.1} parent=1 // pred_fallthru
      _
    // Predicated region
    $region14: #{tpu_custom_call.1} parent=1 // pred_check
      _
    $region15: #{tpu_custom_call.1} parent=1 // pred_check_branch
      %36 = sbr.rel (0) target = $region17
    $region16: #{tpu_custom_call.1} parent=1 // pred_region
      %37 = dma.done [#allocation5], 16
    $region17: #{tpu_custom_call.1} parent=1 // pred_fallthru
      _
    %38 = sfence
    %v39 = vld [vmem:[#allocation2] sm:$0xff]
    %s40 = scalar_lea.vmem [#allocation2], 8
    %v41 = vld [vmem:[%s40] sm:$0xff]
    %s42 = sld [smem:[#allocation6 + $0xf]]
    %v43 = vstv %s42
    %v44 = vmul.f32 %v43, %v41
    %s45 = sld [smem:[#allocation6 + $0xe]]
    %v46 = vstv %s45
    %v47 = vadd.f32 %v44, %v46
    %v48 = vmul.f32 %v47, %v41
    %s49 = sld [smem:[#allocation6 + $0xd]]
    %v50 = vstv %s49
    %v51 = vadd.f32 %v48, %v50
    %v52 = vmul.f32 %v51, %v41
    %s53 = sld [smem:[#allocation6 + $0xc]]
    %v54 = vstv %s53
    %v55 = vadd.f32 %v52, %v54
    %v56 = vmul.f32 %v55, %v39
    %s57 = sld [smem:[#allocation6 + $0xb]]
    %v58 = vstv %s57
    %v59 = vmul.f32 %v58, %v41
    %s60 = sld [smem:[#allocation6 + $0xa]]
    %v61 = vstv %s60
    %v62 = vadd.f32 %v59, %v61
    %v63 = vmul.f32 %v62, %v41
    %s64 = sld [smem:[#allocation6 + $0x9]]
    %v65 = vstv %s64
    %v66 = vadd.f32 %v63, %v65
    %v67 = vmul.f32 %v66, %v41
    %s68 = sld [smem:[#allocation6 + $0x8]]
    %v69 = vstv %s68
    %v70 = vadd.f32 %v67, %v69
    %v71 = vadd.f32 %v56, %v70
    %v72 = vmul.f32 %v71, %v39
    %s73 = sld [smem:[#allocation6 + $0x7]]
    %v74 = vstv %s73
    %v75 = vmul.f32 %v74, %v41
    %s76 = sld [smem:[#allocation6 + $0x6]]
    %v77 = vstv %s76
    %v78 = vadd.f32 %v75, %v77
    %v79 = vmul.f32 %v78, %v41
    %s80 = sld [smem:[#allocation6 + $0x5]]
    %v81 = vstv %s80
    %v82 = vadd.f32 %v79, %v81
    %v83 = vmul.f32 %v82, %v41
    %s84 = sld [smem:[#allocation6 + $0x4]]
    %v85 = vstv %s84
    %v86 = vadd.f32 %v83, %v85
    %v87 = vadd.f32 %v72, %v86
    %v88 = vmul.f32 %v87, %v39
    %s89 = sld [smem:[#allocation6 + $0x3]]
    %v90 = vstv %s89
    %v91 = vmul.f32 %v90, %v41
    %s92 = sld [smem:[#allocation6 + $0x2]]
    %v93 = vstv %s92
    %v94 = vadd.f32 %v91, %v93
    %v95 = vmul.f32 %v94, %v41
    %s96 = sld [smem:[#allocation6 + $0x1]]
    %v97 = vstv %s96
    %v98 = vadd.f32 %v95, %v97
    %v99 = vmul.f32 %v98, %v41
    %s100 = sld [smem:[#allocation6]]
    %v101 = vstv %s100
    %v102 = vadd.f32 %v99, %v101
    %v103 = vadd.f32 %v88, %v102
    %104 = vst [vmem:[#allocation7] sm:$0xff] %v103
    // Predicated region
    $region18: #{tpu_custom_call.1} parent=1 // pred_check
      _
    $region19: #{tpu_custom_call.1} parent=1 // pred_check_branch
      %106 = sbr.rel (0) target = $region21
    $region20: #{tpu_custom_call.1} parent=1 // pred_region
      %s108 = ssub.s32 128, 128
      %109 = vsyncadd [#allocation4], %s108
      %s111 = sshll.u32 [#allocation7], 4
      %s112 = int_to_ptr.vmem [resolvable:$true] %s111
      %114 = dma.vmem_to_hbm [thread:$0]  %s112, 128, %s2, [#allocation4]
    $region21: #{tpu_custom_call.1} parent=1 // pred_fallthru
      _
    // Predicated region
    $region22: #{tpu_custom_call.1} parent=1 // pred_check
      _
    $region23: #{tpu_custom_call.1} parent=1 // pred_check_branch
      %116 = sbr.rel (0) target = $region25
    $region24: #{tpu_custom_call.1} parent=1 // pred_region
      %117 = dma.done [#allocation4], 128
    $region25: #{tpu_custom_call.1} parent=1 // pred_fallthru
      _
    %118 = vsyncpa [#allocation3], 1
    %119 = vsyncpa [#allocation4], 1
    %120 = vsyncpa [#allocation5], 1

</llo_original>
